<compile_context>
chip_gen: v7x
topology: tpu7x:2x2x1
jax: 0.10.0
libtpu: 0.0.40
codegen_flags: <defaults>
</compile_context>

<pallas_src>
import math

import jax
import jax.numpy as jnp
from jax.experimental import pallas as pl
from jax.experimental.pallas import tpu as pltpu


# ----------------------------- kernel -----------------------------

def _make_rope_kernel(n: int):
    """Kernel applying RoPE to n tensors sharing the same cos/sin tables."""

    def kernel(*refs):
        cos_ref, sin_ref = refs[0], refs[1]          # (ts, Dl) f32
        x_refs = refs[2:2 + n]                       # each (bb, ts, Dl)
        o_refs = refs[2 + n:]

        cos = cos_ref[...]
        sin = sin_ref[...]                           # sign already folded in

        blk_shape = x_refs[0].shape                  # all x blocks share shape
        last = len(blk_shape) - 1
        dlane = blk_shape[last]

        # Hoisted parity mask: computed once per grid step, reused for every
        # tensor (JAX does not CSE broadcast_in_dim, so don't re-emit per x).
        lane = jax.lax.broadcasted_iota(jnp.int32, blk_shape, last)
        is_even = (lane & 1) == 0

        for x_ref, o_ref in zip(x_refs, o_refs):
            x = x_ref[...].astype(jnp.float32)       # (bb, ts, Dl)
            # neighbor within each (even, odd) pair, via XLU rolls
            # (non-negative shifts only: roll by Dl-1 == roll by -1).
            nxt = pltpu.roll(x, dlane - 1, last)     # x[j+1]
            prv = pltpu.roll(x, 1, last)             # x[j-1]
            swapped = jnp.where(is_even, nxt, prv)
            y = x * cos + swapped * sin
            o_ref[...] = y.astype(o_ref.dtype)

    return kernel


# ----------------------------- tiling -----------------------------

def _choose_tiles(B, S, Dl, n, itemsize,
                  budget_bytes=28 << 20, ts_target=1024):
    """Pick (batch_block, seq_tile).

    Budget counts *everything* resident per step: f32 cos+sin table blocks and
    n input + n output data blocks, all double-buffered.  28 MiB keeps us
    comfortably inside v7x's 64 MiB physical VMEM and the 48 MiB scoped limit.
    """
    table_bytes_per_row = 2 * Dl * 4              # cos + sin, f32
    data_bytes_per_row = 2 * n * Dl * itemsize    # n inputs + n outputs
    per_row_bb1 = 2 * (table_bytes_per_row + data_bytes_per_row)  # x2 dbl-buf

    ts_budget_rows = max(8, budget_bytes // per_row_bb1)
    if S <= min(ts_target, ts_budget_rows):
        ts = S                                    # full dim: always legal
    else:
        ts = min(ts_target, ts_budget_rows)
        ts = max(8, (ts // 8) * 8)                # multiple of 8 (sublane)

    fixed = 2 * ts * table_bytes_per_row
    per_bb = 2 * ts * data_bytes_per_row
    bb = int(min(B, max(1, (budget_bytes - fixed) // max(1, per_bb))))

    # keep >=2 grid steps whenever possible so both v7x TensorCores get work
    if pl.cdiv(S, ts) == 1 and B > 1 and bb >= B:
        bb = (B + 1) // 2
    return bb, ts


def _rope_pallas(xs, cos, sin_signed):
    """Apply RoPE to each x in xs.  All xs share shape (B, S, Dl)."""
    n = len(xs)
    B, S, Dl = xs[0].shape

    # Lane-density fold: if the lane width isn't a multiple of 128, fold whole
    # seq positions into the lane axis (valid because D is even, so even/odd
    # pairs never straddle a position boundary and lane parity is preserved).
    r = 1
    if Dl % 128 != 0:
        r_cand = math.lcm(Dl, 128) // Dl
        if 1 < r_cand <= 8 and S % r_cand == 0:
            r = r_cand
    if r > 1:
        xs = tuple(x.reshape(B, S // r, r * Dl) for x in xs)
        cos = cos.reshape(S // r, r * Dl)
        sin_signed = sin_signed.reshape(S // r, r * Dl)
        Sg, Dg = S // r, r * Dl
    else:
        Sg, Dg = S, Dl

    itemsize = max(jnp.dtype(x.dtype).itemsize for x in xs)
    bb, ts = _choose_tiles(B, Sg, Dg, n, itemsize)

    # seq tiles outer, batch innermost -> table block index constant across
    # the inner batch loop, so the table re-DMA is elided.
    grid = (pl.cdiv(Sg, ts), pl.cdiv(B, bb))

    tab_spec = pl.BlockSpec((ts, Dg), lambda i, b: (i, 0))
    x_spec = pl.BlockSpec((bb, ts, Dg), lambda i, b: (b, i, 0))

    out_shape = tuple(jax.ShapeDtypeStruct(x.shape, x.dtype) for x in xs)
    # TODO(synk): when callers can donate q/k buffers, add
    # input_output_aliases={2: 0, 3: 1} to make this in-place in HBM.
    outs = pl.pallas_call(
        _make_rope_kernel(n),
        out_shape=out_shape,
        grid=grid,
        in_specs=[tab_spec, tab_spec] + [x_spec] * n,
        out_specs=tuple([x_spec] * n),
        compiler_params=pltpu.CompilerParams(
            dimension_semantics=("parallel", "parallel"),
            vmem_limit_bytes=48 * 1024 * 1024,
        ),
    )(cos, sin_signed, *xs)

    if not isinstance(outs, (list, tuple)):
        outs = (outs,)
    outs = tuple(outs)
    if r > 1:
        outs = tuple(o.reshape(B, S, Dl) for o in outs)
    return outs


# ----------------------------- module -----------------------------

class RotaryEmbedding:
    """JAX/Pallas port of the PyTorch RotaryEmbedding module."""

    def __init__(self, dim_model: int, *_, **__):
        assert dim_model % 2 == 0
        self.dim_model = dim_model
        self.inv_freq = 1.0 / (
            10000.0 ** (jnp.arange(0, dim_model, 2, dtype=jnp.float32) / dim_model)
        )
        # cos/sin tables cached across calls (like the PyTorch buffers)
        self._cache_key = None
        self._cos = None
        self._sin_signed = None

    def _tables(self, seq_len: int, n_rep: int):
        key = (seq_len, n_rep)
        if self._cache_key != key:
            t = jnp.arange(seq_len, dtype=jnp.float32)
            freqs = jnp.outer(t, self.inv_freq)                    # (S, D//2)
            cos = jnp.repeat(jnp.cos(freqs), 2, axis=-1)           # (S, D)
            sin = jnp.repeat(jnp.sin(freqs), 2, axis=-1)           # (S, D)
            # fold rotate_half's alternating sign into the sin table:
            #   even lanes get -sin, odd lanes get +sin
            sign = jnp.where(jnp.arange(self.dim_model) % 2 == 0, -1.0, 1.0)
            sin_signed = sin * sign
            if n_rep > 1:
                # TODO(synk): for many heads with tiny batch, replicate the
                # tables across heads inside the kernel instead of in HBM to
                # save table bandwidth; negligible when the batch loop per
                # seq tile is long.
                cos = jnp.tile(cos, (1, n_rep))
                sin_signed = jnp.tile(sin_signed, (1, n_rep))
            self._cache_key = key
            self._cos = cos
            self._sin_signed = sin_signed
        return self._cos, self._sin_signed

    def __call__(self, q, k, seq_dimension: int = -2):
        assert seq_dimension in (-2, -3)
        assert q.shape[-1] == self.dim_model and k.shape[-1] == self.dim_model

        if seq_dimension == -3:
            # (..., S, H, D): fold heads into the lane axis (no transposes)
            assert q.shape[-2] == k.shape[-2]
            n_rep = q.shape[-2]
            sq, sk = q.shape[-3], k.shape[-3]

            def flatten(x):
                return x.reshape((-1, x.shape[-3], x.shape[-2] * x.shape[-1]))
        else:
            n_rep = 1
            sq, sk = q.shape[-2], k.shape[-2]

            def flatten(x):
                return x.reshape((-1, x.shape[-2], x.shape[-1]))

        assert sq <= sk, "q seq length must not exceed k seq length"
        cos, sin_signed = self._tables(sk, n_rep)

        q3 = flatten(q)
        k3 = flatten(k)

        if q3.shape == k3.shape:
            # fused: one launch, shared table DMA
            oq, ok = _rope_pallas((q3, k3), cos, sin_signed)
        else:
            (oq,) = _rope_pallas((q3,), cos[:sq], sin_signed[:sq])
            (ok,) = _rope_pallas((k3,), cos, sin_signed)

        return oq.reshape(q.shape), ok.reshape(k.shape)


# --------------------- pure-JAX reference (for checking) ---------------------

def _ref_rotate_half(x):
    xp = x.reshape(x.shape[:-1] + (x.shape[-1] // 2, 2))
    x1, x2 = xp[..., 0], xp[..., 1]
    return jnp.stack([-x2, x1], axis=-1).reshape(x.shape)


def _ref_apply(x, cos, sin, seq_dimension=-2):
    cos = cos[: x.shape[seq_dimension], :]
    sin = sin[: x.shape[seq_dimension], :]
    if seq_dimension == -3:
        cos = cos[:, None, :]
        sin = sin[:, None, :]
    return x * cos + _ref_rotate_half(x) * sin


def _ref_tables(seq_len, dim):
    inv_freq = 1.0 / (10000.0 ** (jnp.arange(0, dim, 2, dtype=jnp.float32) / dim))
    t = jnp.arange(seq_len, dtype=jnp.float32)
    freqs = jnp.outer(t, inv_freq)
    cos = jnp.repeat(jnp.cos(freqs), 2, axis=-1)
    sin = jnp.repeat(jnp.sin(freqs), 2, axis=-1)
    return cos, sin


if __name__ == "__main__":
    key = jax.random.PRNGKey(0)
    kq, kk, kq2, kk2 = jax.random.split(key, 4)

    # ---- Case 1: seq_dimension = -2, shape (batch, seq, dim_model) ----
    B, S, D = 2, 8, 128
    q = jax.random.normal(kq, (B, S, D), dtype=jnp.float32)
    k = jax.random.normal(kk, (B, S, D), dtype=jnp.float32)

    rope = RotaryEmbedding(D)
    q_out, k_out = rope(q, k, seq_dimension=-2)
    jax.block_until_ready((q_out, k_out))

    cos, sin = _ref_tables(S, D)
    q_ref = _ref_apply(q, cos, sin, seq_dimension=-2)
    k_ref = _ref_apply(k, cos, sin, seq_dimension=-2)
    assert q_out.shape == q.shape and k_out.shape == k.shape
    assert jnp.allclose(q_out, q_ref, atol=1e-5, rtol=1e-5)
    assert jnp.allclose(k_out, k_ref, atol=1e-5, rtol=1e-5)

    # ---- Case 2: seq_dimension = -3, shape (batch, seq, heads, head_dim) ----
    B2, S2, H2, Dh = 2, 8, 2, 64
    q2 = jax.random.normal(kq2, (B2, S2, H2, Dh), dtype=jnp.float32)
    k2 = jax.random.normal(kk2, (B2, S2, H2, Dh), dtype=jnp.float32)

    rope2 = RotaryEmbedding(Dh)
    q2_out, k2_out = rope2(q2, k2, seq_dimension=-3)
    jax.block_until_ready((q2_out, k2_out))

    cos2, sin2 = _ref_tables(S2, Dh)
    q2_ref = _ref_apply(q2, cos2, sin2, seq_dimension=-3)
    k2_ref = _ref_apply(k2, cos2, sin2, seq_dimension=-3)
    assert q2_out.shape == q2.shape and k2_out.shape == k2.shape
    assert jnp.allclose(q2_out, q2_ref, atol=1e-5, rtol=1e-5)
    assert jnp.allclose(k2_out, k2_ref, atol=1e-5, rtol=1e-5)

    print("KERNEL_OK")
</pallas_src>

<mosaic_0001>
module attributes {stable_mosaic.version = 11 : i64} {
  func.func @kernel(%arg0: i32, %arg1: i32, %arg2: memref<8x128xf32, #tpu.memory_space<vmem>>, %arg3: memref<8x128xf32, #tpu.memory_space<vmem>>, %arg4: memref<1x8x128xf32, #tpu.memory_space<vmem>>, %arg5: memref<1x8x128xf32, #tpu.memory_space<vmem>>, %arg6: memref<1x8x128xf32, #tpu.memory_space<vmem>>, %arg7: memref<1x8x128xf32, #tpu.memory_space<vmem>>) attributes {dimension_semantics = [#tpu.dimension_semantics<parallel>, #tpu.dimension_semantics<parallel>], iteration_bounds = array<i64: 1, 2>, scalar_prefetch = 0 : i64, scratch_operands = 0 : i64, tpu.core_type = #tpu.core_type<tc>, window_params = [{transform_indices = @transform_0, window_bounds = array<i64: 8, 128>}, {transform_indices = @transform_1, window_bounds = array<i64: 8, 128>}, {transform_indices = @transform_2, window_bounds = array<i64: 1, 8, 128>}, {transform_indices = @transform_3, window_bounds = array<i64: 1, 8, 128>}, {transform_indices = @transform_4, window_bounds = array<i64: 1, 8, 128>}, {transform_indices = @transform_5, window_bounds = array<i64: 1, 8, 128>}]} {
    %c0 = arith.constant 0 : index
    %c0_0 = arith.constant 0 : index
    %0 = vector.load %arg2[%c0, %c0_0] : memref<8x128xf32, #tpu.memory_space<vmem>>, vector<8x128xf32>
    %c0_1 = arith.constant 0 : index
    %c0_2 = arith.constant 0 : index
    %1 = vector.load %arg3[%c0_1, %c0_2] : memref<8x128xf32, #tpu.memory_space<vmem>>, vector<8x128xf32>
    %2 = tpu.iota {dimensions = array<i32: 2>} : vector<1x8x128xi32>
    %c1_i32 = arith.constant 1 : i32
    %3 = vector.broadcast %c1_i32 : i32 to vector<1x8x128xi32>
    %4 = arith.andi %2, %3 : vector<1x8x128xi32>
    %c0_i32 = arith.constant 0 : i32
    %5 = vector.broadcast %c0_i32 : i32 to vector<1x8x128xi32>
    %6 = arith.cmpi eq, %4, %5 : vector<1x8x128xi32>
    %c0_3 = arith.constant 0 : index
    %c0_4 = arith.constant 0 : index
    %c0_5 = arith.constant 0 : index
    %7 = vector.load %arg4[%c0_3, %c0_4, %c0_5] : memref<1x8x128xf32, #tpu.memory_space<vmem>>, vector<1x8x128xf32>
    %c127_i32 = arith.constant 127 : i32
    %8 = tpu.dynamic_rotate %7 by %c127_i32 dim 2 : vector<1x8x128xf32>, i32 -> vector<1x8x128xf32>
    %c1_i32_6 = arith.constant 1 : i32
    %9 = tpu.dynamic_rotate %7 by %c1_i32_6 dim 2 : vector<1x8x128xf32>, i32 -> vector<1x8x128xf32>
    %10 = arith.select %6, %8, %9 : vector<1x8x128xi1>, vector<1x8x128xf32>
    %11 = vector.shape_cast %0 : vector<8x128xf32> to vector<1x8x128xf32>
    %12 = arith.mulf %7, %11 : vector<1x8x128xf32>
    %13 = vector.shape_cast %1 : vector<8x128xf32> to vector<1x8x128xf32>
    %14 = arith.mulf %10, %13 : vector<1x8x128xf32>
    %15 = arith.addf %12, %14 : vector<1x8x128xf32>
    %c0_7 = arith.constant 0 : index
    %c0_8 = arith.constant 0 : index
    %c0_9 = arith.constant 0 : index
    %16 = vector.load %arg6[%c0_7, %c0_8, %c0_9] : memref<1x8x128xf32, #tpu.memory_space<vmem>>, vector<1x8x128xf32>
    tpu.vector_store %arg6[%c0_7, %c0_8, %c0_9], %15 {strides = array<i32>} : memref<1x8x128xf32, #tpu.memory_space<vmem>>, vector<1x8x128xf32>,
    %c0_10 = arith.constant 0 : index
    %c0_11 = arith.constant 0 : index
    %c0_12 = arith.constant 0 : index
    %17 = vector.load %arg5[%c0_10, %c0_11, %c0_12] : memref<1x8x128xf32, #tpu.memory_space<vmem>>, vector<1x8x128xf32>
    %c127_i32_13 = arith.constant 127 : i32
    %18 = tpu.dynamic_rotate %17 by %c127_i32_13 dim 2 : vector<1x8x128xf32>, i32 -> vector<1x8x128xf32>
    %c1_i32_14 = arith.constant 1 : i32
    %19 = tpu.dynamic_rotate %17 by %c1_i32_14 dim 2 : vector<1x8x128xf32>, i32 -> vector<1x8x128xf32>
    %20 = arith.select %6, %18, %19 : vector<1x8x128xi1>, vector<1x8x128xf32>
    %21 = vector.shape_cast %0 : vector<8x128xf32> to vector<1x8x128xf32>
    %22 = arith.mulf %17, %21 : vector<1x8x128xf32>
    %23 = vector.shape_cast %1 : vector<8x128xf32> to vector<1x8x128xf32>
    %24 = arith.mulf %20, %23 : vector<1x8x128xf32>
    %25 = arith.addf %22, %24 : vector<1x8x128xf32>
    %c0_15 = arith.constant 0 : index
    %c0_16 = arith.constant 0 : index
    %c0_17 = arith.constant 0 : index
    %26 = vector.load %arg7[%c0_15, %c0_16, %c0_17] : memref<1x8x128xf32, #tpu.memory_space<vmem>>, vector<1x8x128xf32>
    tpu.vector_store %arg7[%c0_15, %c0_16, %c0_17], %25 {strides = array<i32>} : memref<1x8x128xf32, #tpu.memory_space<vmem>>, vector<1x8x128xf32>,
    return
  }
  func.func @transform_0(%arg0: i32, %arg1: i32) -> (i32, i32) {
    %c0_i32 = arith.constant 0 : i32
    %c0_i32_0 = arith.constant 0 : i32
    return %arg0, %c0_i32 : i32, i32
  }
  func.func @transform_1(%arg0: i32, %arg1: i32) -> (i32, i32) {
    %c0_i32 = arith.constant 0 : i32
    %c0_i32_0 = arith.constant 0 : i32
    return %arg0, %c0_i32 : i32, i32
  }
  func.func @transform_2(%arg0: i32, %arg1: i32) -> (i32, i32, i32) {
    %c0_i32 = arith.constant 0 : i32
    %c0_i32_0 = arith.constant 0 : i32
    return %arg1, %arg0, %c0_i32 : i32, i32, i32
  }
  func.func @transform_3(%arg0: i32, %arg1: i32) -> (i32, i32, i32) {
    %c0_i32 = arith.constant 0 : i32
    %c0_i32_0 = arith.constant 0 : i32
    return %arg1, %arg0, %c0_i32 : i32, i32, i32
  }
  func.func @transform_4(%arg0: i32, %arg1: i32) -> (i32, i32, i32) {
    %c0_i32 = arith.constant 0 : i32
    %c0_i32_0 = arith.constant 0 : i32
    return %arg1, %arg0, %c0_i32 : i32, i32, i32
  }
  func.func @transform_5(%arg0: i32, %arg1: i32) -> (i32, i32, i32) {
    %c0_i32 = arith.constant 0 : i32
    %c0_i32_0 = arith.constant 0 : i32
    return %arg1, %arg0, %c0_i32 : i32, i32, i32
  }
}

</mosaic_0001>

<llo_original>
// kernel: tpu_custom_call.1
$region0: #{tpu_custom_call.1}
  #allocation0 [shape = 'u32[]', space=smem, size = 0x4, offset = 0x4, fixed_abs, tag = 'smem constant byte address 0x4 - core index']
  #allocation1 [shape = 'u32[144,128]{1,0:T(1,128)}', space=vmem, size = 0x12000, scoped, tag = 'internal scratch']
  %s0 = inlined_call_operand.hbm [shape: f32[8,128], index: 0, kind: input, shape index: {}]
  %s1 = inlined_call_operand.hbm [shape: f32[8,128], index: 1, kind: input, shape index: {}]
  %s2 = inlined_call_operand.hbm [shape: f32[2,8,128], index: 2, kind: input, shape index: {}]
  %s3 = inlined_call_operand.hbm [shape: f32[2,8,128], index: 3, kind: input, shape index: {}]
  %s4 = inlined_call_operand.hbm [shape: f32[2,8,128], index: 4, kind: output, shape index: {0}]
  %s5 = inlined_call_operand.hbm [shape: f32[2,8,128], index: 5, kind: output, shape index: {1}]
  %6 = xla_tuple %s4, %s5
  %s7 = sld [smem:[#allocation0]]
  $region73: #{tpu_custom_call.1} parent=0
    _
  %s9 = ssub.s32 1, %s7
  %s10 = scalar_select 0, %s9, %s7
  $region1: #{tpu_custom_call.1} parent=0
    #allocation2 [shape = 'u8[4096]{0}', space=vmem, size = 0x1000, scoped, tag = 'input window, operand 0, single buffered']
    #allocation3 [shape = 's32[2]{0}', space=sflag, size = 0x8, scoped, tag = 'scoped memory for tpu_custom_call.1']
    #allocation4 [shape = 's32[2]{0}', space=sflag, size = 0x8, scoped, tag = 'scoped memory for tpu_custom_call.1']
    #allocation5 [shape = 'u8[4096]{0}', space=vmem, size = 0x1000, scoped, tag = 'input window, operand 1, single buffered']
    #allocation6 [shape = 's32[1]{0}', space=sflag, size = 0x4, scoped, tag = 'scoped memory for tpu_custom_call.1']
    #allocation7 [shape = 'u8[8192]{0}', space=vmem, size = 0x2000, scoped, tag = 'input window, operand 2']
    #allocation8 [shape = 'u8[8192]{0}', space=vmem, size = 0x2000, scoped, tag = 'input window, operand 3']
    #allocation9 [shape = 'u8[8192]{0}', space=vmem, size = 0x2000, scoped, tag = 'output window, operand 0']
    #allocation10 [shape = 'u8[8192]{0}', space=vmem, size = 0x2000, scoped, tag = 'output window, operand 1']
    #allocation11 [shape = 's32[2]{0}', space=sflag, size = 0x8, scoped, tag = 'scoped memory for tpu_custom_call.1']
    %11 = vsyncpa [#allocation3], 0
    %12 = vsyncpa [#allocation6], 0
    %13 = vsyncpa [#allocation4], 0
    %s14 = scalar_lea.sflag [#allocation4], 1
    %15 = vsyncpa %s14, 0
    %16 = vsyncpa [#allocation11], 0
    %s17 = scalar_lea.sflag [#allocation11], 1
    %18 = vsyncpa %s17, 0
    loop: start=0, step=1, limit=4
    $region2: #{tpu_custom_call.1} parent=1 // loop_pre_header
      _
    $region3: #{tpu_custom_call.1} parent=1 // loop_header
      %s20 = sphi 0, %s24
      %p21 = scmp.ge.s32.totalorder %s20, 4
      %s27 = sphi 0, %s39
      %s28 = sphi 0, %s35
      %s29 = sphi 0, %s27
      %s30 = sphi 0, %s28
      %s31 = sphi 0, %s29
      %s32 = sphi 0, %s30
      %s42 = sphi 0, %s44
      %s45 = sphi 0, %s42
      %s46 = sphi 0, %s45
      %s62 = sphi 0, %s46
      %s68 = sphi 0, %s70
      %s71 = sphi 0, %s68
      %s72 = sphi 0, %s71
      %s88 = sphi 0, %s72
      %s96 = sphi 0, %s98
      %s99 = sphi 0, %s96
      %s100 = sphi 0, %s99
      %s116 = sphi 0, %s100
      %s124 = sphi 0, %s126
      %s127 = sphi 0, %s124
      %s128 = sphi 0, %s127
      %s144 = sphi 0, %s128
      %s152 = sphi 0, %s154
      %s155 = sphi 0, %s152
      %s156 = sphi 0, %s155
      %s172 = sphi 0, %s156
      %s180 = sphi 0, %s182
      %s183 = sphi 0, %s180
      %s184 = sphi 0, %s183
      %s200 = sphi 0, %s184
    $region4: #{tpu_custom_call.1} parent=1 // loop_header_branch
      %23 = sbr.rel (%p21) target = $region8
    $region5: #{tpu_custom_call.1} parent=1 // loop_body
      %s25 = ssub.s32 %s20, 1
      %s26 = ssub.s32 %s20, 2
      %s33 = sadd.s32 1, %s28
      %p34 = scmp.ge.s32.totalorder %s33, 2
      %s35 = scalar_select %p34, 0, %s33
      %s36 = sadd.s32 1, %s27
      %s37 = scalar_select %p34, %s36, %s27
      %p38 = scmp.ge.s32.totalorder %s37, 1
      %s39 = scalar_select %p38, 0, %s37
      %s40 = ssub.s32 %s27, %s39
      %p41 = scmp.eq.s32.totalorder %s40, 0
      %s43 = sadd.s32 %s42, 1
      %s44 = scalar_select %p41, %s42, %s43
      %p47 = pneg %p41
      %p48 = scmp.eq.s32.totalorder %s20, 1
      %p49 = por %p47, %p48
      %p50 = scmp.ne.s32.totalorder %s42, %s45
      %p51 = scmp.eq.s32.totalorder %s20, 0
      %p52 = por %p50, %p51
      %p53 = scmp.ne.s32.totalorder %s42, %s45
      %p54 = scmp.eq.s32.totalorder %s25, 1
      %p55 = por %p53, %p54
      %p56 = scmp.ne.s32.totalorder %s45, %s46
      %p57 = scmp.eq.s32.totalorder %s25, 0
      %p58 = por %p56, %p57
      %p59 = scmp.ne.s32.totalorder %s45, %s46
      %p60 = scmp.eq.s32.totalorder %s26, 1
      %p61 = por %p59, %p60
      %p63 = scmp.ne.s32.totalorder %s46, %s62
      %p64 = scmp.eq.s32.totalorder %s26, 0
      %p65 = por %p63, %p64
      %s66 = ssub.s32 %s27, %s39
      %p67 = scmp.eq.s32.totalorder %s66, 0
      %s69 = sadd.s32 %s68, 1
      %s70 = scalar_select %p67, %s68, %s69
      %p73 = pneg %p67
      %p74 = scmp.eq.s32.totalorder %s20, 1
      %p75 = por %p73, %p74
      %p76 = scmp.ne.s32.totalorder %s68, %s71
      %p77 = scmp.eq.s32.totalorder %s20, 0
      %p78 = por %p76, %p77
      %p79 = scmp.ne.s32.totalorder %s68, %s71
      %p80 = scmp.eq.s32.totalorder %s25, 1
      %p81 = por %p79, %p80
      %p82 = scmp.ne.s32.totalorder %s71, %s72
      %p83 = scmp.eq.s32.totalorder %s25, 0
      %p84 = por %p82, %p83
      %p85 = scmp.ne.s32.totalorder %s71, %s72
      %p86 = scmp.eq.s32.totalorder %s26, 1
      %p87 = por %p85, %p86
      %p89 = scmp.ne.s32.totalorder %s72, %s88
      %p90 = scmp.eq.s32.totalorder %s26, 0
      %p91 = por %p89, %p90
      %s92 = ssub.s32 %s28, %s35
      %s93 = ssub.s32 %s27, %s39
      %s94 = sor.u32 %s92, %s93
      %p95 = scmp.eq.s32.totalorder %s94, 0
      %s97 = sadd.s32 %s96, 1
      %s98 = scalar_select %p95, %s96, %s97
      %p101 = pneg %p95
      %p102 = scmp.eq.s32.totalorder %s20, 1
      %p103 = por %p101, %p102
      %p104 = scmp.ne.s32.totalorder %s96, %s99
      %p105 = scmp.eq.s32.totalorder %s20, 0
      %p106 = por %p104, %p105
      %p107 = scmp.ne.s32.totalorder %s96, %s99
      %p108 = scmp.eq.s32.totalorder %s25, 1
      %p109 = por %p107, %p108
      %p110 = scmp.ne.s32.totalorder %s99, %s100
      %p111 = scmp.eq.s32.totalorder %s25, 0
      %p112 = por %p110, %p111
      %p113 = scmp.ne.s32.totalorder %s99, %s100
      %p114 = scmp.eq.s32.totalorder %s26, 1
      %p115 = por %p113, %p114
      %p117 = scmp.ne.s32.totalorder %s100, %s116
      %p118 = scmp.eq.s32.totalorder %s26, 0
      %p119 = por %p117, %p118
      %s120 = ssub.s32 %s28, %s35
      %s121 = ssub.s32 %s27, %s39
      %s122 = sor.u32 %s120, %s121
      %p123 = scmp.eq.s32.totalorder %s122, 0
      %s125 = sadd.s32 %s124, 1
      %s126 = scalar_select %p123, %s124, %s125
      %p129 = pneg %p123
      %p130 = scmp.eq.s32.totalorder %s20, 1
      %p131 = por %p129, %p130
      %p132 = scmp.ne.s32.totalorder %s124, %s127
      %p133 = scmp.eq.s32.totalorder %s20, 0
      %p134 = por %p132, %p133
      %p135 = scmp.ne.s32.totalorder %s124, %s127
      %p136 = scmp.eq.s32.totalorder %s25, 1
      %p137 = por %p135, %p136
      %p138 = scmp.ne.s32.totalorder %s127, %s128
      %p139 = scmp.eq.s32.totalorder %s25, 0
      %p140 = por %p138, %p139
      %p141 = scmp.ne.s32.totalorder %s127, %s128
      %p142 = scmp.eq.s32.totalorder %s26, 1
      %p143 = por %p141, %p142
      %p145 = scmp.ne.s32.totalorder %s128, %s144
      %p146 = scmp.eq.s32.totalorder %s26, 0
      %p147 = por %p145, %p146
      %s148 = ssub.s32 %s28, %s35
      %s149 = ssub.s32 %s27, %s39
      %s150 = sor.u32 %s148, %s149
      %p151 = scmp.eq.s32.totalorder %s150, 0
      %s153 = sadd.s32 %s152, 1
      %s154 = scalar_select %p151, %s152, %s153
      %p157 = pneg %p151
      %p158 = scmp.eq.s32.totalorder %s20, 1
      %p159 = por %p157, %p158
      %p160 = scmp.ne.s32.totalorder %s152, %s155
      %p161 = scmp.eq.s32.totalorder %s20, 0
      %p162 = por %p160, %p161
      %p163 = scmp.ne.s32.totalorder %s152, %s155
      %p164 = scmp.eq.s32.totalorder %s25, 1
      %p165 = por %p163, %p164
      %p166 = scmp.ne.s32.totalorder %s155, %s156
      %p167 = scmp.eq.s32.totalorder %s25, 0
      %p168 = por %p166, %p167
      %p169 = scmp.ne.s32.totalorder %s155, %s156
      %p170 = scmp.eq.s32.totalorder %s26, 1
      %p171 = por %p169, %p170
      %p173 = scmp.ne.s32.totalorder %s156, %s172
      %p174 = scmp.eq.s32.totalorder %s26, 0
      %p175 = por %p173, %p174
      %s176 = ssub.s32 %s28, %s35
      %s177 = ssub.s32 %s27, %s39
      %s178 = sor.u32 %s176, %s177
      %p179 = scmp.eq.s32.totalorder %s178, 0
      %s181 = sadd.s32 %s180, 1
      %s182 = scalar_select %p179, %s180, %s181
      %p185 = pneg %p179
      %p186 = scmp.eq.s32.totalorder %s20, 1
      %p187 = por %p185, %p186
      %p188 = scmp.ne.s32.totalorder %s180, %s183
      %p189 = scmp.eq.s32.totalorder %s20, 0
      %p190 = por %p188, %p189
      %p191 = scmp.ne.s32.totalorder %s180, %s183
      %p192 = scmp.eq.s32.totalorder %s25, 1
      %p193 = por %p191, %p192
      %p194 = scmp.ne.s32.totalorder %s183, %s184
      %p195 = scmp.eq.s32.totalorder %s25, 0
      %p196 = por %p194, %p195
      %p197 = scmp.ne.s32.totalorder %s183, %s184
      %p198 = scmp.eq.s32.totalorder %s26, 1
      %p199 = por %p197, %p198
      %p201 = scmp.ne.s32.totalorder %s184, %s200
      %p202 = scmp.eq.s32.totalorder %s26, 0
      %p203 = por %p201, %p202
      %p204 = scmp.le.s32.totalorder 1, %s20
      %p205 = scmp.lt.s32.totalorder %s20, 3
      %p206 = pnand %p204, %p205
      %p207 = pneg %p206
      // Predicated region
      $region9: #{tpu_custom_call.1} parent=5 // pred_check
        _
      $region10: #{tpu_custom_call.1} parent=5 // pred_check_branch
        %209 = sbr.rel (%p206) target = $region12
      $region11: #{tpu_custom_call.1} parent=5 // pred_region
        %s210 = ssub.s32 %s20, 1
        // Predicated region
        $region13: #{tpu_custom_call.1} parent=11 // pred_check
          %p211 = pneg %p58
        $region14: #{tpu_custom_call.1} parent=11 // pred_check_branch
          %213 = sbr.rel (%p211) target = $region16
        $region15: #{tpu_custom_call.1} parent=11 // pred_region
          %s215 = ssub.s32 128, 128
          %216 = vsyncadd [#allocation3], %s215
          %s217 = smul.addr %s29, 128
          %s218 = scalar_lea.hbm %s0, %s217
          %s220 = sshll.u32 [#allocation2], 4
          %s221 = int_to_ptr.vmem [resolvable:$true] %s220
          %223 = dma.hbm_to_vmem [thread:$0]  %s218, 128, %s221, [#allocation3]
        $region16: #{tpu_custom_call.1} parent=11 // pred_fallthru
          _
        // Predicated region
        $region17: #{tpu_custom_call.1} parent=11 // pred_check
          %p224 = pneg %p84
        $region18: #{tpu_custom_call.1} parent=11 // pred_check_branch
          %226 = sbr.rel (%p224) target = $region20
        $region19: #{tpu_custom_call.1} parent=11 // pred_region
          %s228 = ssub.s32 128, 128
          %229 = vsyncadd [#allocation6], %s228
          %s230 = smul.addr %s29, 128
          %s231 = scalar_lea.hbm %s1, %s230
          %s233 = sshll.u32 [#allocation5], 4
          %s234 = int_to_ptr.vmem [resolvable:$true] %s233
          %236 = dma.hbm_to_vmem [thread:$0]  %s231, 128, %s234, [#allocation6]
        $region20: #{tpu_custom_call.1} parent=11 // pred_fallthru
          _
      $region12: #{tpu_custom_call.1} parent=5 // pred_fallthru
        _
      %p237 = scmp.lt.s32.totalorder %s20, 2
      // Predicated region
      $region21: #{tpu_custom_call.1} parent=5 // pred_check
        %p238 = pneg %p237
      $region22: #{tpu_custom_call.1} parent=5 // pred_check_branch
        %240 = sbr.rel (%p238) target = $region24
      $region23: #{tpu_custom_call.1} parent=5 // pred_region
        // Predicated region
        $region25: #{tpu_custom_call.1} parent=23 // pred_check
          %p241 = pneg %p106
        $region26: #{tpu_custom_call.1} parent=23 // pred_check_branch
          %243 = sbr.rel (%p241) target = $region28
        $region27: #{tpu_custom_call.1} parent=23 // pred_region
          %s244 = sand.u32 %s20, 1
          %s245 = scalar_lea.sflag [#allocation3], %s244
          %s246 = sand.u32 %s96, 1
          %s247 = smul.addr %s246, 8
          %s248 = scalar_lea.vmem [#allocation7], %s247
          %s250 = ssub.s32 128, 128
          %251 = vsyncadd %s245, %s250
          %s252 = sadd.s32 %s27, %s28
          %s253 = smul.addr %s252, 128
          %s254 = scalar_lea.hbm %s2, %s253
          %s256 = sshll.u32 %s248, 4
          %s257 = int_to_ptr.vmem [resolvable:$true] %s256
          %259 = dma.hbm_to_vmem [thread:$0]  %s254, 128, %s257, %s245
        $region28: #{tpu_custom_call.1} parent=23 // pred_fallthru
          _
        // Predicated region
        $region29: #{tpu_custom_call.1} parent=23 // pred_check
          %p260 = pneg %p134
        $region30: #{tpu_custom_call.1} parent=23 // pred_check_branch
          %262 = sbr.rel (%p260) target = $region32
        $region31: #{tpu_custom_call.1} parent=23 // pred_region
          %s263 = sand.u32 %s20, 1
          %s264 = scalar_lea.sflag [#allocation3], %s263
          %s265 = sand.u32 %s124, 1
          %s266 = smul.addr %s265, 8
          %s267 = scalar_lea.vmem [#allocation8], %s266
          %s269 = ssub.s32 128, 128
          %270 = vsyncadd %s264, %s269
          %s271 = sadd.s32 %s27, %s28
          %s272 = smul.addr %s271, 128
          %s273 = scalar_lea.hbm %s3, %s272
          %s275 = sshll.u32 %s267, 4
          %s276 = int_to_ptr.vmem [resolvable:$true] %s275
          %278 = dma.hbm_to_vmem [thread:$0]  %s273, 128, %s276, %s264
        $region32: #{tpu_custom_call.1} parent=23 // pred_fallthru
          _
      $region24: #{tpu_custom_call.1} parent=5 // pred_fallthru
        _
      %p279 = scmp.le.s32.totalorder 1, %s20
      %p280 = scmp.lt.s32.totalorder %s20, 3
      %p281 = pnand %p279, %p280
      %p282 = pneg %p281
      // Predicated region
      $region33: #{tpu_custom_call.1} parent=5 // pred_check
        _
      $region34: #{tpu_custom_call.1} parent=5 // pred_check_branch
        %284 = sbr.rel (%p281) target = $region36
      $region35: #{tpu_custom_call.1} parent=5 // pred_region
        %s285 = ssub.s32 %s20, 1
        // Predicated region
        $region37: #{tpu_custom_call.1} parent=35 // pred_check
          %p286 = pneg %p58
        $region38: #{tpu_custom_call.1} parent=35 // pred_check_branch
          %288 = sbr.rel (%p286) target = $region40
        $region39: #{tpu_custom_call.1} parent=35 // pred_region
          %289 = dma.done [#allocation3], 128
        $region40: #{tpu_custom_call.1} parent=35 // pred_fallthru
          _
        // Predicated region
        $region41: #{tpu_custom_call.1} parent=35 // pred_check
          %p290 = pneg %p84
        $region42: #{tpu_custom_call.1} parent=35 // pred_check_branch
          %292 = sbr.rel (%p290) target = $region44
        $region43: #{tpu_custom_call.1} parent=35 // pred_region
          %293 = dma.done [#allocation6], 128
        $region44: #{tpu_custom_call.1} parent=35 // pred_fallthru
          _
        %s294 = sand.u32 %s25, 1
        %s295 = scalar_lea.sflag [#allocation3], %s294
        %s296 = sand.u32 %s99, 1
        %s297 = smul.addr %s296, 8
        %s298 = scalar_lea.vmem [#allocation7], %s297
        // Predicated region
        $region45: #{tpu_custom_call.1} parent=35 // pred_check
          %p299 = pneg %p112
        $region46: #{tpu_custom_call.1} parent=35 // pred_check_branch
          %301 = sbr.rel (%p299) target = $region48
        $region47: #{tpu_custom_call.1} parent=35 // pred_region
          %302 = dma.done %s295, 128
        $region48: #{tpu_custom_call.1} parent=35 // pred_fallthru
          _
        %s303 = sand.u32 %s25, 1
        %s304 = scalar_lea.sflag [#allocation3], %s303
        %s305 = sand.u32 %s127, 1
        %s306 = smul.addr %s305, 8
        %s307 = scalar_lea.vmem [#allocation8], %s306
        // Predicated region
        $region49: #{tpu_custom_call.1} parent=35 // pred_check
          %p308 = pneg %p140
        $region50: #{tpu_custom_call.1} parent=35 // pred_check_branch
          %310 = sbr.rel (%p308) target = $region52
        $region51: #{tpu_custom_call.1} parent=35 // pred_region
          %311 = dma.done %s304, 128
        $region52: #{tpu_custom_call.1} parent=35 // pred_fallthru
          _
        %p312 = pneg %p58
        %p313 = pneg %p55
        %p314 = pneg %p84
        %p315 = pneg %p81
        %s316 = sand.u32 %s25, 1
        %s317 = scalar_lea.sflag [#allocation3], %s316
        %s318 = sand.u32 %s99, 1
        %s319 = smul.addr %s318, 8
        %s320 = scalar_lea.vmem [#allocation7], %s319
        %p321 = pneg %p112
        %p322 = pneg %p109
        %s323 = sand.u32 %s25, 1
        %s324 = scalar_lea.sflag [#allocation3], %s323
        %s325 = sand.u32 %s127, 1
        %s326 = smul.addr %s325, 8
        %s327 = scalar_lea.vmem [#allocation8], %s326
        %p328 = pneg %p140
        %p329 = pneg %p137
        %p330 = pneg %p168
        %p331 = pneg %p165
        %s332 = sand.u32 %s155, 1
        %s333 = scalar_lea.sflag [#allocation4], %s332
        %s334 = sand.u32 %s155, 1
        %s335 = smul.addr %s334, 8
        %s336 = scalar_lea.vmem [#allocation9], %s335
        %p337 = pneg %p196
        %p338 = pneg %p193
        %s339 = sand.u32 %s183, 1
        %s340 = scalar_lea.sflag [#allocation11], %s339
        %s341 = sand.u32 %s183, 1
        %s342 = smul.addr %s341, 8
        %s343 = scalar_lea.vmem [#allocation10], %s342
        %v344 = vld [vmem:[#allocation2] sm:$0xff]
        %v345 = vld [vmem:[#allocation5] sm:$0xff]
        %v346 = vlaneseq
        %v347 = vand.u32 %v346, 127
        %v348 = vand.u32 %v347, 1
        %vm349 = vcmp.eq.s32.totalorder %v348, 0
        %v350 = vld [vmem:[%s298] sm:$0xff]
        %351 = vrot.lane.b32.xlu0 %v350, 127
        %v352 = vpop.permute.xlu0 %351
        %353 = vrot.lane.b32.xlu0 %v350, 1
        %v354 = vpop.permute.xlu0 %353
        %v355 = vsel %vm349, %v352, %v354
        %v356 = vmul.f32 %v350, %v344
        %v357 = vmul.f32 %v355, %v345
        %v358 = vadd.f32 %v356, %v357
        %359 = vst [vmem:[%s336] sm:$0xff] %v358
        %v360 = vld [vmem:[%s307] sm:$0xff]
        %361 = vrot.lane.b32.xlu0 %v360, 127
        %v362 = vpop.permute.xlu0 %361
        %363 = vrot.lane.b32.xlu0 %v360, 1
        %v364 = vpop.permute.xlu0 %363
        %v365 = vsel %vm349, %v362, %v364
        %v366 = vmul.f32 %v360, %v344
        %v367 = vmul.f32 %v365, %v345
        %v368 = vadd.f32 %v366, %v367
        %369 = vst [vmem:[%s343] sm:$0xff] %v368
        %s370 = sand.u32 %s155, 1
        %s371 = scalar_lea.sflag [#allocation4], %s370
        %s372 = sand.u32 %s155, 1
        %s373 = smul.addr %s372, 8
        %s374 = scalar_lea.vmem [#allocation9], %s373
        %s375 = sand.u32 %s183, 1
        %s376 = scalar_lea.sflag [#allocation11], %s375
        %s377 = sand.u32 %s183, 1
        %s378 = smul.addr %s377, 8
        %s379 = scalar_lea.vmem [#allocation10], %s378
        // Predicated region
        $region53: #{tpu_custom_call.1} parent=35 // pred_check
          %p380 = pneg %p165
        $region54: #{tpu_custom_call.1} parent=35 // pred_check_branch
          %382 = sbr.rel (%p380) target = $region56
        $region55: #{tpu_custom_call.1} parent=35 // pred_region
          %s384 = ssub.s32 128, 128
          %385 = vsyncadd %s371, %s384
          %s386 = sadd.s32 %s29, %s30
          %s387 = smul.addr %s386, 128
          %s388 = scalar_lea.hbm %s4, %s387
          %s390 = sshll.u32 %s374, 4
          %s391 = int_to_ptr.vmem [resolvable:$true] %s390
          %393 = dma.vmem_to_hbm [thread:$0]  %s391, 128, %s388, %s371
        $region56: #{tpu_custom_call.1} parent=35 // pred_fallthru
          _
        // Predicated region
        $region57: #{tpu_custom_call.1} parent=35 // pred_check
          %p394 = pneg %p193
        $region58: #{tpu_custom_call.1} parent=35 // pred_check_branch
          %396 = sbr.rel (%p394) target = $region60
        $region59: #{tpu_custom_call.1} parent=35 // pred_region
          %s398 = ssub.s32 128, 128
          %399 = vsyncadd %s376, %s398
          %s400 = sadd.s32 %s29, %s30
          %s401 = smul.addr %s400, 128
          %s402 = scalar_lea.hbm %s5, %s401
          %s404 = sshll.u32 %s379, 4
          %s405 = int_to_ptr.vmem [resolvable:$true] %s404
          %407 = dma.vmem_to_hbm [thread:$0]  %s405, 128, %s402, %s376
        $region60: #{tpu_custom_call.1} parent=35 // pred_fallthru
          _
      $region36: #{tpu_custom_call.1} parent=5 // pred_fallthru
        _
      %p408 = scmp.le.s32.totalorder 2, %s20
      // Predicated region
      $region61: #{tpu_custom_call.1} parent=5 // pred_check
        %p409 = pneg %p408
      $region62: #{tpu_custom_call.1} parent=5 // pred_check_branch
        %411 = sbr.rel (%p409) target = $region64
      $region63: #{tpu_custom_call.1} parent=5 // pred_region
        %s412 = ssub.s32 %s20, 2
        // Predicated region
        $region65: #{tpu_custom_call.1} parent=63 // pred_check
          %p413 = pneg %p171
        $region66: #{tpu_custom_call.1} parent=63 // pred_check_branch
          %415 = sbr.rel (%p413) target = $region68
        $region67: #{tpu_custom_call.1} parent=63 // pred_region
          %s416 = sand.u32 %s156, 1
          %s417 = scalar_lea.sflag [#allocation4], %s416
          %s418 = sand.u32 %s156, 1
          %s419 = smul.addr %s418, 8
          %s420 = scalar_lea.vmem [#allocation9], %s419
          %421 = dma.done %s417, 128
        $region68: #{tpu_custom_call.1} parent=63 // pred_fallthru
          _
        // Predicated region
        $region69: #{tpu_custom_call.1} parent=63 // pred_check
          %p422 = pneg %p199
        $region70: #{tpu_custom_call.1} parent=63 // pred_check_branch
          %424 = sbr.rel (%p422) target = $region72
        $region71: #{tpu_custom_call.1} parent=63 // pred_region
          %s425 = sand.u32 %s184, 1
          %s426 = scalar_lea.sflag [#allocation11], %s425
          %s427 = sand.u32 %s184, 1
          %s428 = smul.addr %s427, 8
          %s429 = scalar_lea.vmem [#allocation10], %s428
          %430 = dma.done %s426, 128
        $region72: #{tpu_custom_call.1} parent=63 // pred_fallthru
          _
      $region64: #{tpu_custom_call.1} parent=5 // pred_fallthru
        _
    $region6: #{tpu_custom_call.1} parent=1 // loop_footer
      %s24 = sadd.s32 1, %s20
    $region7: #{tpu_custom_call.1} parent=1 // loop_footer_branch
      %19 = sbr.rel target = $region3
    $region8: #{tpu_custom_call.1} parent=1 // loop_exit
      _
    %431 = vsyncpa [#allocation3], 1
    %s432 = scalar_lea.sflag [#allocation3], 1
    %433 = vsyncpa %s432, 1
    %434 = vsyncpa [#allocation6], 1
    %435 = vsyncpa [#allocation4], 1
    %s436 = scalar_lea.sflag [#allocation4], 1
    %437 = vsyncpa %s436, 1
    %438 = vsyncpa [#allocation11], 1
    %s439 = scalar_lea.sflag [#allocation11], 1
    %440 = vsyncpa %s439, 1

</llo_original>
